<compile_context>
chip_gen: v5e
topology: v5e:2x2
jax: 0.10.0
libtpu: 0.0.40
codegen_flags: <defaults>
</compile_context>

<pallas_src>
import jax
import jax.numpy as jnp
from jax.experimental import pallas as pl
from jax.experimental.pallas import tpu as pltpu

BN_EPS = 1e-5


# ------------------------- fused Pallas kernel -------------------------

def _make_fused_kernel(hidden_dims, n_hidden, lane_dense):
    """Fused MLP kernel: all hidden blocks + sigmoid head in one body.

    hidden_dims: output dim of every hidden layer, e.g. (64, 32).
    All intermediate activations live in registers/VMEM; only the input tile
    and the final logits tile touch HBM.
    """

    def kernel(x_ref, *refs):
        w_refs = refs[:n_hidden]              # resident [in, out] weights (BN-folded)
        w_head_ref = refs[n_hidden]           # [1, d_last] head weight row (f32)
        b_ref = refs[n_hidden + 1]            # packed biases [n_hidden+1, max_d] (f32)
        o_ref = refs[n_hidden + 2]

        b_pack = b_ref[...]
        h = x_ref[...]                        # stream dtype (f32 or bf16)

        # hidden blocks: (BN-folded) Linear -> bias -> ReLU (Dropout = identity).
        # MXU accumulates in f32; bias/ReLU stay f32; recast to the stream dtype
        # only to feed the next matmul.
        for i in range(n_hidden):
            d = hidden_dims[i]
            y = jnp.dot(h, w_refs[i][...], preferred_element_type=jnp.float32)
            y = jnp.maximum(y + b_pack[i:i + 1, :d], 0.0)
            h = y if i + 1 == n_hidden else y.astype(x_ref.dtype)

        # output head: no MXU push for N=1 -- VPU multiply + lane reduction.
        w_head = w_head_ref[...]                                   # [1, d_last] f32
        y_col = jnp.sum(h * w_head, axis=-1, keepdims=True)        # [tb, 1] f32
        b_out = b_pack[n_hidden:n_hidden + 1, 0:1]                 # [1, 1]

        if lane_dense:
            # lane-dense store: small XLU transpose, then bias/sigmoid on the
            # (cheap) [1, tb] row, single unmasked vst instead of tb/8 vst.msk.
            y_row = jnp.transpose(y_col)                           # [1, tb]
            o_ref[...] = jax.nn.sigmoid(y_row + b_out)
        else:
            o_ref[...] = jax.nn.sigmoid(y_col + b_out)             # [tb, 1] column

    return kernel


# ------------------------- wrapper -------------------------

def _choose_batch_tile(B, batch_tile):
    """Pick the per-step batch tile.

    * big tiles (default 1024) amortize the fixed per-grid-step cost;
    * when B is large, force >= 2 grid steps so the "parallel" batch axis can
      shard across v7x's two TensorCores;
    * multi-tile runs keep tb a multiple of 128 so the lane-dense output block
      stays 128-aligned (single-tile runs just use the full batch).
    """
    if batch_tile is None or B <= batch_tile:
        if B > 512:
            return 128 * pl.cdiv(pl.cdiv(B, 2), 128)
        return B
    return 128 * pl.cdiv(batch_tile, 128)


def fused_forward(x, w_list, w_head, b_pack, *, batch_tile=1024, lane_dense_out=True):
    """Single pallas_call for the whole network.

    Weights/biases are VMEM-resident across the batch grid; the batch axis is
    "parallel" so big batches pipeline input DMAs and split across cores.
    """
    B, d_in = x.shape
    n_hidden = len(w_list)
    hidden_dims = tuple(int(w.shape[1]) for w in w_list)

    stream_dtype = w_list[0].dtype if n_hidden else jnp.float32
    if x.dtype != stream_dtype:
        x = x.astype(stream_dtype)            # bf16 streaming halves input HBM traffic

    tb = max(1, _choose_batch_tile(B, batch_tile))
    num_tiles = pl.cdiv(B, tb)
    Bp = num_tiles * tb
    if Bp != B:
        # ragged batch: pad (zeros) instead of asserting; padded rows sliced off below.
        x = jnp.pad(x, ((0, Bp - B), (0, 0)))

    in_specs = [pl.BlockSpec((tb, d_in), lambda i: (i, 0))]
    for w in w_list:                                   # resident hidden weights
        in_specs.append(pl.BlockSpec(w.shape, lambda i: (0, 0)))
    in_specs.append(pl.BlockSpec(w_head.shape, lambda i: (0, 0)))   # head weight row
    in_specs.append(pl.BlockSpec(b_pack.shape, lambda i: (0, 0)))   # packed biases

    if lane_dense_out:
        out_shape = jax.ShapeDtypeStruct((1, Bp), jnp.float32)
        out_specs = pl.BlockSpec((1, tb), lambda i: (0, i))
    else:
        out_shape = jax.ShapeDtypeStruct((Bp, 1), jnp.float32)
        out_specs = pl.BlockSpec((tb, 1), lambda i: (i, 0))

    out = pl.pallas_call(
        _make_fused_kernel(hidden_dims, n_hidden, lane_dense_out),
        out_shape=out_shape,
        grid=(num_tiles,),
        in_specs=in_specs,
        out_specs=out_specs,
        compiler_params=pltpu.CompilerParams(
            dimension_semantics=("parallel",),
            # double-buffered x tiles + resident weights stay far below this on
            # every generation; v7x physical VMEM is 64 MiB, so do not blindly
            # raise it if this wrapper is reused for much wider MLPs.
            vmem_limit_bytes=32 * 1024 * 1024,
        ),
    )(x, *w_list, w_head, b_pack)

    if lane_dense_out:
        out = out.reshape(Bp, 1)              # free: same row-major flat layout
    return out[:B]


# ------------------------- parameter prep (done once) -------------------------

def prepare_params(params, head, dtype=jnp.float32):
    """Fold eval-mode BN into the linears, pre-transpose weights, pack biases.

      s     = gamma / sqrt(var + eps)
      W_eff = W^T * s          (shape [in, out], cast to `dtype` for streaming)
      b_eff = (b - mean) * s + beta   (kept f32)

    Head weight stays f32 (it feeds the VPU head, not the MXU).
    """
    w_list, b_list = [], []
    for p in params:
        s = p["gamma"] / jnp.sqrt(p["var"] + BN_EPS)
        w_list.append((p["w"].T * s[None, :]).astype(dtype))
        b_list.append(((p["b"] - p["mean"]) * s + p["beta"]).astype(jnp.float32))
    w_out, b_out = head
    w_head = w_out.astype(jnp.float32)        # [1, d_last]
    b_list.append(b_out.astype(jnp.float32))  # head bias -> last row, col 0

    max_d = max(int(b.shape[0]) for b in b_list)
    b_pack = jnp.stack(
        [jnp.pad(b, (0, max_d - b.shape[0])) for b in b_list]
    ).astype(jnp.float32)
    return tuple(w_list), w_head, b_pack


# ------------------------- model params & reference -------------------------

def init_params(key, layers):
    """Deterministic parameter init mirroring the PyTorch module's shapes."""
    params = []
    for idx in range(len(layers) - 1):
        d_in, d_out = layers[idx], layers[idx + 1]
        key, k_w, k_b, k_m, k_v = jax.random.split(key, 5)
        bound = 1.0 / jnp.sqrt(d_in)
        w = jax.random.uniform(k_w, (d_out, d_in), jnp.float32, -bound, bound)
        b = jax.random.uniform(k_b, (d_out,), jnp.float32, -bound, bound)
        gamma = jnp.ones((d_out,), jnp.float32)
        beta = jnp.zeros((d_out,), jnp.float32)
        # non-trivial deterministic "running" stats so the BN math is exercised
        mean = 0.1 * jax.random.normal(k_m, (d_out,), jnp.float32)
        var = 1.0 + 0.1 * jax.random.uniform(k_v, (d_out,), jnp.float32)
        params.append(dict(w=w, b=b, gamma=gamma, beta=beta, mean=mean, var=var))
    d_in = layers[-1]
    key, k_w, k_b = jax.random.split(key, 3)
    bound = 1.0 / jnp.sqrt(d_in)
    w_out = jax.random.uniform(k_w, (1, d_in), jnp.float32, -bound, bound)
    b_out = jax.random.uniform(k_b, (1,), jnp.float32, -bound, bound)
    return params, (w_out, b_out)


def reference_forward(x, params, head):
    """Pure-JAX reference (eval mode, un-folded BN) for correctness checking."""
    for p in params:
        y = x @ p["w"].T + p["b"]
        y = (y - p["mean"]) / jnp.sqrt(p["var"] + BN_EPS) * p["gamma"] + p["beta"]
        x = jnp.maximum(y, 0.0)
    w_out, b_out = head
    return jax.nn.sigmoid(x @ w_out.T + b_out)


if __name__ == "__main__":
    model_hyperparameter = {"dropout": 0.1, "layers": [32, 64, 32]}
    layers = model_hyperparameter["layers"]

    key = jax.random.PRNGKey(0)
    key_x, key_x2, key_p = jax.random.split(key, 3)
    params, head = init_params(key_p, layers)

    fwd = jax.jit(fused_forward, static_argnames=("batch_tile", "lane_dense_out"))

    # ---- small batch, strict f32 correctness check ----
    x_small = jax.random.normal(key_x, (8, layers[0]), jnp.float32)
    w32, w_head32, b_pack32 = prepare_params(params, head, dtype=jnp.float32)
    ref_small = reference_forward(x_small, params, head)

    def _run_small(lane_dense_flag):
        o = jax.block_until_ready(
            fwd(x_small, w32, w_head32, b_pack32,
                batch_tile=1024, lane_dense_out=lane_dense_flag))
        assert o.shape == (8, 1), o.shape
        assert jnp.allclose(o, ref_small, atol=1e-5, rtol=1e-5)
        return o

    lane_dense = True
    try:
        out_small = _run_small(True)
    except Exception:
        # TODO(synk): if this Mosaic build rejects the [tb,1]->[1,tb] relayout
        # used for the lane-dense store, fall back to the masked column store.
        lane_dense = False
        out_small = _run_small(False)

    # ---- larger ragged batch: multi-step "parallel" grid, padding, bf16 streaming ----
    B2 = 1000
    x_big = jax.random.normal(key_x2, (B2, layers[0]), jnp.float32)
    wbf, w_headbf, b_packbf = prepare_params(params, head, dtype=jnp.bfloat16)
    out_big = jax.block_until_ready(
        fwd(x_big, wbf, w_headbf, b_packbf,
            batch_tile=1024, lane_dense_out=lane_dense))
    ref_big = reference_forward(x_big, params, head)
    assert out_big.shape == (B2, 1), out_big.shape
    assert jnp.allclose(out_big, ref_big, atol=2e-2, rtol=2e-2), \
        float(jnp.max(jnp.abs(out_big - ref_big)))

    print("KERNEL_OK")
</pallas_src>

<mosaic_0001>
module attributes {stable_mosaic.version = 11 : i64} {
  func.func @kernel(%arg0: i32, %arg1: memref<8x32xf32, #tpu.memory_space<vmem>>, %arg2: memref<32x64xf32, #tpu.memory_space<vmem>>, %arg3: memref<64x32xf32, #tpu.memory_space<vmem>>, %arg4: memref<1x32xf32, #tpu.memory_space<vmem>>, %arg5: memref<3x64xf32, #tpu.memory_space<vmem>>, %arg6: memref<1x8xf32, #tpu.memory_space<vmem>>) attributes {dimension_semantics = [#tpu.dimension_semantics<parallel>], iteration_bounds = array<i64: 1>, scalar_prefetch = 0 : i64, scratch_operands = 0 : i64, tpu.core_type = #tpu.core_type<tc>, window_params = [{transform_indices = @transform_0, window_bounds = array<i64: 8, 32>}, {pipeline_mode = #tpu.pipeline_mode<synchronous>, transform_indices = @transform_1, window_bounds = array<i64: 32, 64>}, {pipeline_mode = #tpu.pipeline_mode<synchronous>, transform_indices = @transform_2, window_bounds = array<i64: 64, 32>}, {pipeline_mode = #tpu.pipeline_mode<synchronous>, transform_indices = @transform_3, window_bounds = array<i64: 1, 32>}, {pipeline_mode = #tpu.pipeline_mode<synchronous>, transform_indices = @transform_4, window_bounds = array<i64: 3, 64>}, {transform_indices = @transform_5, window_bounds = array<i64: 1, 8>}]} {
    %c0 = arith.constant 0 : index
    %c0_0 = arith.constant 0 : index
    %0 = vector.load %arg5[%c0, %c0_0] : memref<3x64xf32, #tpu.memory_space<vmem>>, vector<3x64xf32>
    %c0_1 = arith.constant 0 : index
    %c0_2 = arith.constant 0 : index
    %1 = vector.load %arg1[%c0_1, %c0_2] : memref<8x32xf32, #tpu.memory_space<vmem>>, vector<8x32xf32>
    %c0_3 = arith.constant 0 : index
    %c0_4 = arith.constant 0 : index
    %2 = vector.load %arg2[%c0_3, %c0_4] : memref<32x64xf32, #tpu.memory_space<vmem>>, vector<32x64xf32>
    %cst = arith.constant dense<0.000000e+00> : vector<8x64xf32>
    %3 = tpu.matmul %1, %2, %cst {dimension_numbers = #tpu.dot_dimension_numbers<[1], [0], [0], [1], [0, 0, 1, 1], [], []>} : vector<8x32xf32>, vector<32x64xf32>, vector<8x64xf32> -> vector<8x64xf32>
    %4 = vector.extract_strided_slice %0 {offsets = [0, 0], sizes = [1, 64], strides = [1, 1]} : vector<3x64xf32> to vector<1x64xf32>
    %5 = vector.broadcast %4 : vector<1x64xf32> to vector<8x64xf32>
    %6 = arith.addf %3, %5 : vector<8x64xf32>
    %cst_5 = arith.constant 0.000000e+00 : f32
    %7 = vector.broadcast %cst_5 : f32 to vector<8x64xf32>
    %8 = arith.maximumf %6, %7 : vector<8x64xf32>
    %c0_6 = arith.constant 0 : index
    %c0_7 = arith.constant 0 : index
    %9 = vector.load %arg3[%c0_6, %c0_7] : memref<64x32xf32, #tpu.memory_space<vmem>>, vector<64x32xf32>
    %cst_8 = arith.constant dense<0.000000e+00> : vector<8x32xf32>
    %10 = tpu.matmul %8, %9, %cst_8 {dimension_numbers = #tpu.dot_dimension_numbers<[1], [0], [0], [1], [0, 0, 1, 1], [], []>} : vector<8x64xf32>, vector<64x32xf32>, vector<8x32xf32> -> vector<8x32xf32>
    %11 = vector.extract_strided_slice %0 {offsets = [1, 0], sizes = [1, 32], strides = [1, 1]} : vector<3x64xf32> to vector<1x32xf32>
    %12 = vector.broadcast %11 : vector<1x32xf32> to vector<8x32xf32>
    %13 = arith.addf %10, %12 : vector<8x32xf32>
    %cst_9 = arith.constant 0.000000e+00 : f32
    %14 = vector.broadcast %cst_9 : f32 to vector<8x32xf32>
    %15 = arith.maximumf %13, %14 : vector<8x32xf32>
    %c0_10 = arith.constant 0 : index
    %c0_11 = arith.constant 0 : index
    %16 = vector.load %arg4[%c0_10, %c0_11] : memref<1x32xf32, #tpu.memory_space<vmem>>, vector<1x32xf32>
    %17 = vector.broadcast %16 : vector<1x32xf32> to vector<8x32xf32>
    %18 = arith.mulf %15, %17 : vector<8x32xf32>
    %cst_12 = arith.constant dense<0.000000e+00> : vector<8xf32>
    %19 = vector.multi_reduction <add>, %18, %cst_12 [1] : vector<8x32xf32> to vector<8xf32>
    %20 = vector.shape_cast %19 : vector<8xf32> to vector<8x1xf32>
    %21 = vector.extract_strided_slice %0 {offsets = [2, 0], sizes = [1, 1], strides = [1, 1]} : vector<3x64xf32> to vector<1x1xf32>
    %22 = tpu.transpose %20, [1, 0] : vector<8x1xf32> -> vector<1x8xf32>
    %23 = vector.broadcast %21 : vector<1x1xf32> to vector<1x8xf32>
    %24 = arith.addf %22, %23 : vector<1x8xf32>
    %25 = arith.negf %24 : vector<1x8xf32>
    %26 = math.exp %25 : vector<1x8xf32>
    %cst_13 = arith.constant 1.000000e+00 : f32
    %27 = vector.broadcast %cst_13 : f32 to vector<1x8xf32>
    %28 = arith.addf %27, %26 : vector<1x8xf32>
    %29 = arith.divf %27, %28 : vector<1x8xf32>
    %c0_14 = arith.constant 0 : index
    %c0_15 = arith.constant 0 : index
    %30 = vector.load %arg6[%c0_14, %c0_15] : memref<1x8xf32, #tpu.memory_space<vmem>>, vector<1x8xf32>
    tpu.vector_store %arg6[%c0_14, %c0_15], %29 {strides = array<i32>} : memref<1x8xf32, #tpu.memory_space<vmem>>, vector<1x8xf32>,
    return
  }
  func.func @transform_0(%arg0: i32) -> (i32, i32) {
    %c0_i32 = arith.constant 0 : i32
    %c0_i32_0 = arith.constant 0 : i32
    return %arg0, %c0_i32 : i32, i32
  }
  func.func @transform_1(%arg0: i32) -> (i32, i32) {
    %c0_i32 = arith.constant 0 : i32
    %c0_i32_0 = arith.constant 0 : i32
    %c0_i32_1 = arith.constant 0 : i32
    return %c0_i32, %c0_i32_0 : i32, i32
  }
  func.func @transform_2(%arg0: i32) -> (i32, i32) {
    %c0_i32 = arith.constant 0 : i32
    %c0_i32_0 = arith.constant 0 : i32
    %c0_i32_1 = arith.constant 0 : i32
    return %c0_i32, %c0_i32_0 : i32, i32
  }
  func.func @transform_3(%arg0: i32) -> (i32, i32) {
    %c0_i32 = arith.constant 0 : i32
    %c0_i32_0 = arith.constant 0 : i32
    %c0_i32_1 = arith.constant 0 : i32
    return %c0_i32, %c0_i32_0 : i32, i32
  }
  func.func @transform_4(%arg0: i32) -> (i32, i32) {
    %c0_i32 = arith.constant 0 : i32
    %c0_i32_0 = arith.constant 0 : i32
    %c0_i32_1 = arith.constant 0 : i32
    return %c0_i32, %c0_i32_0 : i32, i32
  }
  func.func @transform_5(%arg0: i32) -> (i32, i32) {
    %c0_i32 = arith.constant 0 : i32
    %c0_i32_0 = arith.constant 0 : i32
    return %c0_i32, %arg0 : i32, i32
  }
}

module attributes {stable_mosaic.version = 11 : i64} {
  func.func @kernel(%arg0: i32, %arg1: memref<8x32xf32, #tpu.memory_space<vmem>>, %arg2: memref<32x64xf32, #tpu.memory_space<vmem>>, %arg3: memref<64x32xf32, #tpu.memory_space<vmem>>, %arg4: memref<1x32xf32, #tpu.memory_space<vmem>>, %arg5: memref<3x64xf32, #tpu.memory_space<vmem>>, %arg6: memref<8x1xf32, #tpu.memory_space<vmem>>) attributes {dimension_semantics = [#tpu.dimension_semantics<parallel>], iteration_bounds = array<i64: 1>, scalar_prefetch = 0 : i64, scratch_operands = 0 : i64, tpu.core_type = #tpu.core_type<tc>, window_params = [{transform_indices = @transform_0, window_bounds = array<i64: 8, 32>}, {pipeline_mode = #tpu.pipeline_mode<synchronous>, transform_indices = @transform_1, window_bounds = array<i64: 32, 64>}, {pipeline_mode = #tpu.pipeline_mode<synchronous>, transform_indices = @transform_2, window_bounds = array<i64: 64, 32>}, {pipeline_mode = #tpu.pipeline_mode<synchronous>, transform_indices = @transform_3, window_bounds = array<i64: 1, 32>}, {pipeline_mode = #tpu.pipeline_mode<synchronous>, transform_indices = @transform_4, window_bounds = array<i64: 3, 64>}, {transform_indices = @transform_5, window_bounds = array<i64: 8, 1>}]} {
    %c0 = arith.constant 0 : index
    %c0_0 = arith.constant 0 : index
    %0 = vector.load %arg5[%c0, %c0_0] : memref<3x64xf32, #tpu.memory_space<vmem>>, vector<3x64xf32>
    %c0_1 = arith.constant 0 : index
    %c0_2 = arith.constant 0 : index
    %1 = vector.load %arg1[%c0_1, %c0_2] : memref<8x32xf32, #tpu.memory_space<vmem>>, vector<8x32xf32>
    %c0_3 = arith.constant 0 : index
    %c0_4 = arith.constant 0 : index
    %2 = vector.load %arg2[%c0_3, %c0_4] : memref<32x64xf32, #tpu.memory_space<vmem>>, vector<32x64xf32>
    %cst = arith.constant dense<0.000000e+00> : vector<8x64xf32>
    %3 = tpu.matmul %1, %2, %cst {dimension_numbers = #tpu.dot_dimension_numbers<[1], [0], [0], [1], [0, 0, 1, 1], [], []>} : vector<8x32xf32>, vector<32x64xf32>, vector<8x64xf32> -> vector<8x64xf32>
    %4 = vector.extract_strided_slice %0 {offsets = [0, 0], sizes = [1, 64], strides = [1, 1]} : vector<3x64xf32> to vector<1x64xf32>
    %5 = vector.broadcast %4 : vector<1x64xf32> to vector<8x64xf32>
    %6 = arith.addf %3, %5 : vector<8x64xf32>
    %cst_5 = arith.constant 0.000000e+00 : f32
    %7 = vector.broadcast %cst_5 : f32 to vector<8x64xf32>
    %8 = arith.maximumf %6, %7 : vector<8x64xf32>
    %c0_6 = arith.constant 0 : index
    %c0_7 = arith.constant 0 : index
    %9 = vector.load %arg3[%c0_6, %c0_7] : memref<64x32xf32, #tpu.memory_space<vmem>>, vector<64x32xf32>
    %cst_8 = arith.constant dense<0.000000e+00> : vector<8x32xf32>
    %10 = tpu.matmul %8, %9, %cst_8 {dimension_numbers = #tpu.dot_dimension_numbers<[1], [0], [0], [1], [0, 0, 1, 1], [], []>} : vector<8x64xf32>, vector<64x32xf32>, vector<8x32xf32> -> vector<8x32xf32>
    %11 = vector.extract_strided_slice %0 {offsets = [1, 0], sizes = [1, 32], strides = [1, 1]} : vector<3x64xf32> to vector<1x32xf32>
    %12 = vector.broadcast %11 : vector<1x32xf32> to vector<8x32xf32>
    %13 = arith.addf %10, %12 : vector<8x32xf32>
    %cst_9 = arith.constant 0.000000e+00 : f32
    %14 = vector.broadcast %cst_9 : f32 to vector<8x32xf32>
    %15 = arith.maximumf %13, %14 : vector<8x32xf32>
    %c0_10 = arith.constant 0 : index
    %c0_11 = arith.constant 0 : index
    %16 = vector.load %arg4[%c0_10, %c0_11] : memref<1x32xf32, #tpu.memory_space<vmem>>, vector<1x32xf32>
    %17 = vector.broadcast %16 : vector<1x32xf32> to vector<8x32xf32>
    %18 = arith.mulf %15, %17 : vector<8x32xf32>
    %cst_12 = arith.constant dense<0.000000e+00> : vector<8xf32>
    %19 = vector.multi_reduction <add>, %18, %cst_12 [1] : vector<8x32xf32> to vector<8xf32>
    %20 = vector.shape_cast %19 : vector<8xf32> to vector<8x1xf32>
    %21 = vector.extract_strided_slice %0 {offsets = [2, 0], sizes = [1, 1], strides = [1, 1]} : vector<3x64xf32> to vector<1x1xf32>
    %22 = vector.broadcast %21 : vector<1x1xf32> to vector<8x1xf32>
    %23 = arith.addf %20, %22 : vector<8x1xf32>
    %24 = arith.negf %23 : vector<8x1xf32>
    %25 = math.exp %24 : vector<8x1xf32>
    %cst_13 = arith.constant 1.000000e+00 : f32
    %26 = vector.broadcast %cst_13 : f32 to vector<8x1xf32>
    %27 = arith.addf %26, %25 : vector<8x1xf32>
    %28 = arith.divf %26, %27 : vector<8x1xf32>
    %c0_14 = arith.constant 0 : index
    %c0_15 = arith.constant 0 : index
    %29 = vector.load %arg6[%c0_14, %c0_15] : memref<8x1xf32, #tpu.memory_space<vmem>>, vector<8x1xf32>
    tpu.vector_store %arg6[%c0_14, %c0_15], %28 {strides = array<i32>} : memref<8x1xf32, #tpu.memory_space<vmem>>, vector<8x1xf32>,
    return
  }
  func.func @transform_0(%arg0: i32) -> (i32, i32) {
    %c0_i32 = arith.constant 0 : i32
    %c0_i32_0 = arith.constant 0 : i32
    return %arg0, %c0_i32 : i32, i32
  }
  func.func @transform_1(%arg0: i32) -> (i32, i32) {
    %c0_i32 = arith.constant 0 : i32
    %c0_i32_0 = arith.constant 0 : i32
    %c0_i32_1 = arith.constant 0 : i32
    return %c0_i32, %c0_i32_0 : i32, i32
  }
  func.func @transform_2(%arg0: i32) -> (i32, i32) {
    %c0_i32 = arith.constant 0 : i32
    %c0_i32_0 = arith.constant 0 : i32
    %c0_i32_1 = arith.constant 0 : i32
    return %c0_i32, %c0_i32_0 : i32, i32
  }
  func.func @transform_3(%arg0: i32) -> (i32, i32) {
    %c0_i32 = arith.constant 0 : i32
    %c0_i32_0 = arith.constant 0 : i32
    %c0_i32_1 = arith.constant 0 : i32
    return %c0_i32, %c0_i32_0 : i32, i32
  }
  func.func @transform_4(%arg0: i32) -> (i32, i32) {
    %c0_i32 = arith.constant 0 : i32
    %c0_i32_0 = arith.constant 0 : i32
    %c0_i32_1 = arith.constant 0 : i32
    return %c0_i32, %c0_i32_0 : i32, i32
  }
  func.func @transform_5(%arg0: i32) -> (i32, i32) {
    %c0_i32 = arith.constant 0 : i32
    %c0_i32_0 = arith.constant 0 : i32
    return %arg0, %c0_i32 : i32, i32
  }
}

</mosaic_0001>

<llo_original>
// kernel: fused_forward.1
$region0: #{fused_forward.1}
  #allocation0 [shape = 'u32[]', space=smem, size = 0x4, offset = 0x4, fixed_abs, tag = 'smem constant byte address 0x4 - core index']
  #allocation1 [shape = 'u32[72,128]{1,0:T(1,128)}', space=vmem, size = 0x9000, scoped, tag = 'internal scratch']
  %s0 = inlined_call_operand.vmem [shape: f32[8,32], index: 0, kind: input, shape index: {}]
  %s1 = inlined_call_operand.vmem [shape: f32[32,64], index: 1, kind: input, shape index: {}]
  %s2 = inlined_call_operand.vmem [shape: f32[64,32], index: 2, kind: input, shape index: {}]
  %s3 = inlined_call_operand.vmem [shape: f32[1,32], index: 3, kind: input, shape index: {}]
  %s4 = inlined_call_operand.vmem [shape: f32[3,64], index: 4, kind: input, shape index: {}]
  %s5 = inlined_call_operand.hbm [shape: f32[1,8], index: 5, kind: output, shape index: {}]
  %s6 = sld [smem:[#allocation0]]
  $region30: #{fused_forward.1} parent=0
    _
  %s8 = ssub.s32 1, %s6
  %s9 = scalar_select 0, %s8, %s6
  $region1: #{fused_forward.1} parent=0
    #allocation2 [shape = 'u8[512]{0}', space=vmem, size = 0x400, scoped, tag = 'output window, operand 0, single buffered']
    #allocation3 [shape = 's32[1]{0}', space=sflag, size = 0x4, scoped, tag = 'scoped memory for fused_forward.1']
    %10 = vsyncpa [#allocation3], 0
    // Predicated region
    $region2: #{fused_forward.1} parent=1 // pred_check
      _
    $region3: #{fused_forward.1} parent=1 // pred_check_branch
      %12 = sbr.rel (0) target = $region5
    $region4: #{fused_forward.1} parent=1 // pred_region
      _
    $region5: #{fused_forward.1} parent=1 // pred_fallthru
      _
    // Predicated region
    $region6: #{fused_forward.1} parent=1 // pred_check
      _
    $region7: #{fused_forward.1} parent=1 // pred_check_branch
      %14 = sbr.rel (0) target = $region9
    $region8: #{fused_forward.1} parent=1 // pred_region
      _
    $region9: #{fused_forward.1} parent=1 // pred_fallthru
      _
    // Predicated region
    $region10: #{fused_forward.1} parent=1 // pred_check
      _
    $region11: #{fused_forward.1} parent=1 // pred_check_branch
      %16 = sbr.rel (0) target = $region13
    $region12: #{fused_forward.1} parent=1 // pred_region
      _
    $region13: #{fused_forward.1} parent=1 // pred_fallthru
      _
    // Predicated region
    $region14: #{fused_forward.1} parent=1 // pred_check
      _
    $region15: #{fused_forward.1} parent=1 // pred_check_branch
      %18 = sbr.rel (0) target = $region17
    $region16: #{fused_forward.1} parent=1 // pred_region
      _
    $region17: #{fused_forward.1} parent=1 // pred_fallthru
      _
    // Predicated region
    $region18: #{fused_forward.1} parent=1 // pred_check
      _
    $region19: #{fused_forward.1} parent=1 // pred_check_branch
      %20 = sbr.rel (0) target = $region21
    $region20: #{fused_forward.1} parent=1 // pred_region
      _
    $region21: #{fused_forward.1} parent=1 // pred_fallthru
      _
    %v21 = vld [vmem:[%s4] sm:$0x7]
    %v22 = vld [vmem:[%s0] sm:$0xff]
    %v23 = vld [vmem:[%s1] sm:$0xff]
    %v24 = vld [vmem:[%s1 + $0x8] sm:$0xff]
    %v25 = vld [vmem:[%s1 + $0x10] sm:$0xff]
    %v26 = vld [vmem:[%s1 + $0x18] sm:$0xff]
    %v27 = vperm.slane %v21, 0
    %vm28 = vcmask 261120
    %v30 = vsel %vm28, %v22, 0
    %32 = vmatpush.msra.mxu0 0.0
    %33 = vmatpush.msra.mxu0 0.0
    %34 = vmatpush.msra.mxu0 0.0
    %35 = vmatpush.msra.mxu0 0.0
    %36 = vmatpush.msra.mxu0 0.0
    %37 = vmatpush.msra.mxu0 0.0
    %38 = vmatpush.msra.mxu0 0.0
    %39 = vmatpush.msra.mxu0 0.0
    %40 = vmatpush.msra.mxu0 0.0
    %41 = vmatpush.msra.mxu0 0.0
    %42 = vmatpush.msra.mxu0 0.0
    %43 = vmatpush.msra.mxu0 0.0
    %44 = vmatpush.msra.mxu0 %v26
    %45 = vmatpush.msra.mxu0 %v25
    %46 = vmatpush.msra.mxu0 %v24
    %47 = vmatpush.msra.mxu0 %v23
    %48 = vmatmul.f32.gmra.mxu0 %v30
    %v49 = vpop.f32.mrf.mxu0
    %v50 = vadd.f32 %v27, %v49
    %51 = vdwg.mxu0
    %v52 = vmax.f32 %v50, 0.0
    %v53 = vld [vmem:[%s2] sm:$0xff]
    %v54 = vld [vmem:[%s2 + $0x8] sm:$0xff]
    %v55 = vld [vmem:[%s2 + $0x10] sm:$0xff]
    %v56 = vld [vmem:[%s2 + $0x18] sm:$0xff]
    %v57 = vld [vmem:[%s2 + $0x20] sm:$0xff]
    %v58 = vld [vmem:[%s2 + $0x28] sm:$0xff]
    %v59 = vld [vmem:[%s2 + $0x30] sm:$0xff]
    %v60 = vld [vmem:[%s2 + $0x38] sm:$0xff]
    %v61 = vperm.slane %v21, 1
    %vm62 = vcmask 523264
    %v64 = vsel %vm62, %v52, 0
    %66 = vmatpush.msra.mxu0 0.0
    %67 = vmatpush.msra.mxu0 0.0
    %68 = vmatpush.msra.mxu0 0.0
    %69 = vmatpush.msra.mxu0 0.0
    %70 = vmatpush.msra.mxu0 0.0
    %71 = vmatpush.msra.mxu0 0.0
    %72 = vmatpush.msra.mxu0 0.0
    %73 = vmatpush.msra.mxu0 0.0
    %74 = vmatpush.msra.mxu0 %v60
    %75 = vmatpush.msra.mxu0 %v59
    %76 = vmatpush.msra.mxu0 %v58
    %77 = vmatpush.msra.mxu0 %v57
    %78 = vmatpush.msra.mxu0 %v56
    %79 = vmatpush.msra.mxu0 %v55
    %80 = vmatpush.msra.mxu0 %v54
    %81 = vmatpush.msra.mxu0 %v53
    %82 = vmatmul.f32.gmra.mxu0 %v64
    %v83 = vpop.f32.mrf.mxu0
    %v84 = vadd.f32 %v61, %v83
    %85 = vdwg.mxu0
    %v86 = vmax.f32 %v84, 0.0
    %v87 = vld [vmem:[%s3] sm:$0x1]
    %v89 = vperm.slane %v87, 0
    %v91 = vmul.f32 %v86, %v89
    %v92 = vsel %vm28, %v91, 0.0
    %93 = vadd.xlane.f32.xlu0 %v92
    %v94 = vpop.xlane.xlu0 %93
    %95 = vxpose.xlu0.b32.start [1/16] %v94, 128
    %96 = vxpose.xlu0.b32.cont [2/16] 0.0, 128
    %97 = vxpose.xlu0.b32.cont [3/16] 0.0, 128
    %98 = vxpose.xlu0.b32.cont [4/16] 0.0, 128
    %99 = vxpose.xlu0.b32.cont [5/16] 0.0, 128
    %100 = vxpose.xlu0.b32.cont [6/16] 0.0, 128
    %101 = vxpose.xlu0.b32.cont [7/16] 0.0, 128
    %102 = vxpose.xlu0.b32.cont [8/16] 0.0, 128
    %103 = vxpose.xlu0.b32.cont [9/16] 0.0, 128
    %104 = vxpose.xlu0.b32.cont [10/16] 0.0, 128
    %105 = vxpose.xlu0.b32.cont [11/16] 0.0, 128
    %106 = vxpose.xlu0.b32.cont [12/16] 0.0, 128
    %107 = vxpose.xlu0.b32.cont [13/16] 0.0, 128
    %108 = vxpose.xlu0.b32.cont [14/16] 0.0, 128
    %109 = vxpose.xlu0.b32.cont [15/16] 0.0, 128
    %110 = vxpose.xlu0.b32.end [16/16] 0.0, 128
    %v111 = vpop.trf.xlu0
    %v112 = vpop.trf.xlu0
    %v113 = vpop.trf.xlu0
    %v114 = vpop.trf.xlu0
    %v115 = vpop.trf.xlu0
    %v116 = vpop.trf.xlu0
    %v117 = vpop.trf.xlu0
    %v118 = vpop.trf.xlu0
    %v119 = vpop.trf.xlu0
    %v120 = vpop.trf.xlu0
    %v121 = vpop.trf.xlu0
    %v122 = vpop.trf.xlu0
    %v123 = vpop.trf.xlu0
    %v124 = vpop.trf.xlu0
    %v125 = vpop.trf.xlu0
    %v126 = vpop.trf.xlu0
    %128 = vset.pattern.permute.xlu0 0
    %129 = vperm.xlu0 %128, %v21
    %v130 = vpop.permute.xlu0 %129
    %v131 = vrot.slane %v130, 2
    %v133 = vadd.f32 %v111, %v131
    %v134 = vxor.u32 %v133, 2147483648
    %v135 = vmul.f32 %v134, 1.442695
    %v136 = vpow.pop %v135
    %v137 = vadd.f32 %v136, 1.0
    %v138 = vrcp.pop %v137
    %v139 = vmul.f32 %v137, %v138
    %v140 = vsub.f32 1.0, %v139
    %v141 = vmul.f32 %v138, %v140
    %v142 = vadd.f32 %v138, %v141
    %vm143 = vweird.f32 %v137
    %vm144 = vweird.f32 %v138
    %vm145 = vmor %vm143, %vm144
    %v146 = vsel %vm145, %v138, %v142
    %v147 = vand.u32 2147483647, %v137
    %vm148 = vcmp.eq.f32.partialorder %v147, 8.507059e+37
    %v149 = vand.u32 %v137, 2147483648
    %v150 = vor.u32 1.1754944e-38, %v149
    %v151 = vsel %vm148, %v150, %v146
    %v152 = vmul.f32 1.0, %v151
    %vm153 = vcmask 57344
    %154 = vst.msk [vmem:[#allocation2] sm:$0x1] %vm153, %v152
    // Predicated region
    $region22: #{fused_forward.1} parent=1 // pred_check
      _
    $region23: #{fused_forward.1} parent=1 // pred_check_branch
      %156 = sbr.rel (0) target = $region25
    $region24: #{fused_forward.1} parent=1 // pred_region
      %158 = vsyncadd [#allocation3], 0
      %s160 = sshll.u32 [#allocation2], 4
      %s161 = int_to_ptr.vmem [resolvable:$true] %s160
      %s162 = sshll.u32 %s5, 4
      %s163 = int_to_ptr.hbm [resolvable:$true] %s162
      %165 = dma.vmem_to_hbm [thread:$0]  %s161, 16, %s163, [#allocation3]
    $region25: #{fused_forward.1} parent=1 // pred_fallthru
      _
    // Predicated region
    $region26: #{fused_forward.1} parent=1 // pred_check
      _
    $region27: #{fused_forward.1} parent=1 // pred_check_branch
      %167 = sbr.rel (0) target = $region29
    $region28: #{fused_forward.1} parent=1 // pred_region
      %169 = dma.done [#allocation3], 16
    $region29: #{fused_forward.1} parent=1 // pred_fallthru
      _
    %170 = vsyncpa [#allocation3], 1

// kernel: fused_forward.1
$region0: #{fused_forward.1}
  #allocation0 [shape = 'u32[]', space=smem, size = 0x4, offset = 0x4, fixed_abs, tag = 'smem constant byte address 0x4 - core index']
  #allocation1 [shape = 'u32[72,128]{1,0:T(1,128)}', space=vmem, size = 0x9000, scoped, tag = 'internal scratch']
  %s0 = inlined_call_operand.vmem [shape: f32[8,32], index: 0, kind: input, shape index: {}]
  %s1 = inlined_call_operand.vmem [shape: f32[32,64], index: 1, kind: input, shape index: {}]
  %s2 = inlined_call_operand.vmem [shape: f32[64,32], index: 2, kind: input, shape index: {}]
  %s3 = inlined_call_operand.vmem [shape: f32[1,32], index: 3, kind: input, shape index: {}]
  %s4 = inlined_call_operand.vmem [shape: f32[3,64], index: 4, kind: input, shape index: {}]
  %s5 = inlined_call_operand.vmem [shape: f32[8,1], index: 5, kind: output, shape index: {}]
  %s6 = sld [smem:[#allocation0]]
  $region30: #{fused_forward.1} parent=0
    _
  %s8 = ssub.s32 1, %s6
  %s9 = scalar_select 0, %s8, %s6
  // Predicated region
  $region2: #{fused_forward.1} parent=0 // pred_check
    _
  $region3: #{fused_forward.1} parent=0 // pred_check_branch
    %11 = sbr.rel (0) target = $region5
  $region4: #{fused_forward.1} parent=0 // pred_region
    _
  $region5: #{fused_forward.1} parent=0 // pred_fallthru
    _
  // Predicated region
  $region6: #{fused_forward.1} parent=0 // pred_check
    _
  $region7: #{fused_forward.1} parent=0 // pred_check_branch
    %13 = sbr.rel (0) target = $region9
  $region8: #{fused_forward.1} parent=0 // pred_region
    _
  $region9: #{fused_forward.1} parent=0 // pred_fallthru
    _
  // Predicated region
  $region10: #{fused_forward.1} parent=0 // pred_check
    _
  $region11: #{fused_forward.1} parent=0 // pred_check_branch
    %15 = sbr.rel (0) target = $region13
  $region12: #{fused_forward.1} parent=0 // pred_region
    _
  $region13: #{fused_forward.1} parent=0 // pred_fallthru
    _
  // Predicated region
  $region14: #{fused_forward.1} parent=0 // pred_check
    _
  $region15: #{fused_forward.1} parent=0 // pred_check_branch
    %17 = sbr.rel (0) target = $region17
  $region16: #{fused_forward.1} parent=0 // pred_region
    _
  $region17: #{fused_forward.1} parent=0 // pred_fallthru
    _
  // Predicated region
  $region18: #{fused_forward.1} parent=0 // pred_check
    _
  $region19: #{fused_forward.1} parent=0 // pred_check_branch
    %19 = sbr.rel (0) target = $region21
  $region20: #{fused_forward.1} parent=0 // pred_region
    _
  $region21: #{fused_forward.1} parent=0 // pred_fallthru
    _
  %v20 = vld [vmem:[%s4] sm:$0x7]
  %v21 = vld [vmem:[%s0] sm:$0xff]
  %v22 = vld [vmem:[%s1] sm:$0xff]
  %v23 = vld [vmem:[%s1 + $0x8] sm:$0xff]
  %v24 = vld [vmem:[%s1 + $0x10] sm:$0xff]
  %v25 = vld [vmem:[%s1 + $0x18] sm:$0xff]
  %v26 = vperm.slane %v20, 0
  %vm27 = vcmask 261120
  %v29 = vsel %vm27, %v21, 0
  %31 = vmatpush.msra.mxu0 0.0
  %32 = vmatpush.msra.mxu0 0.0
  %33 = vmatpush.msra.mxu0 0.0
  %34 = vmatpush.msra.mxu0 0.0
  %35 = vmatpush.msra.mxu0 0.0
  %36 = vmatpush.msra.mxu0 0.0
  %37 = vmatpush.msra.mxu0 0.0
  %38 = vmatpush.msra.mxu0 0.0
  %39 = vmatpush.msra.mxu0 0.0
  %40 = vmatpush.msra.mxu0 0.0
  %41 = vmatpush.msra.mxu0 0.0
  %42 = vmatpush.msra.mxu0 0.0
  %43 = vmatpush.msra.mxu0 %v25
  %44 = vmatpush.msra.mxu0 %v24
  %45 = vmatpush.msra.mxu0 %v23
  %46 = vmatpush.msra.mxu0 %v22
  %47 = vmatmul.f32.gmra.mxu0 %v29
  %v48 = vpop.f32.mrf.mxu0
  %v49 = vadd.f32 %v26, %v48
  %50 = vdwg.mxu0
  %v51 = vmax.f32 %v49, 0.0
  %v52 = vld [vmem:[%s2] sm:$0xff]
  %v53 = vld [vmem:[%s2 + $0x8] sm:$0xff]
  %v54 = vld [vmem:[%s2 + $0x10] sm:$0xff]
  %v55 = vld [vmem:[%s2 + $0x18] sm:$0xff]
  %v56 = vld [vmem:[%s2 + $0x20] sm:$0xff]
  %v57 = vld [vmem:[%s2 + $0x28] sm:$0xff]
  %v58 = vld [vmem:[%s2 + $0x30] sm:$0xff]
  %v59 = vld [vmem:[%s2 + $0x38] sm:$0xff]
  %v60 = vperm.slane %v20, 1
  %vm61 = vcmask 523264
  %v63 = vsel %vm61, %v51, 0
  %65 = vmatpush.msra.mxu0 0.0
  %66 = vmatpush.msra.mxu0 0.0
  %67 = vmatpush.msra.mxu0 0.0
  %68 = vmatpush.msra.mxu0 0.0
  %69 = vmatpush.msra.mxu0 0.0
  %70 = vmatpush.msra.mxu0 0.0
  %71 = vmatpush.msra.mxu0 0.0
  %72 = vmatpush.msra.mxu0 0.0
  %73 = vmatpush.msra.mxu0 %v59
  %74 = vmatpush.msra.mxu0 %v58
  %75 = vmatpush.msra.mxu0 %v57
  %76 = vmatpush.msra.mxu0 %v56
  %77 = vmatpush.msra.mxu0 %v55
  %78 = vmatpush.msra.mxu0 %v54
  %79 = vmatpush.msra.mxu0 %v53
  %80 = vmatpush.msra.mxu0 %v52
  %81 = vmatmul.f32.gmra.mxu0 %v63
  %v82 = vpop.f32.mrf.mxu0
  %v83 = vadd.f32 %v60, %v82
  %84 = vdwg.mxu0
  %v85 = vmax.f32 %v83, 0.0
  %v86 = vld [vmem:[%s3] sm:$0x1]
  %v88 = vperm.slane %v86, 0
  %v90 = vmul.f32 %v85, %v88
  %v91 = vsel %vm27, %v90, 0.0
  %92 = vadd.xlane.f32.xlu0 %v91
  %v93 = vpop.xlane.xlu0 %92
  %v94 = vperm.slane %v20, 2
  %v95 = vadd.f32 %v93, %v94
  %v96 = vxor.u32 %v95, 2147483648
  %v97 = vmul.f32 %v96, 1.442695
  %v98 = vpow.pop %v97
  %v99 = vadd.f32 %v98, 1.0
  %v100 = vrcp.pop %v99
  %v101 = vmul.f32 %v99, %v100
  %v102 = vsub.f32 1.0, %v101
  %v103 = vmul.f32 %v100, %v102
  %v104 = vadd.f32 %v100, %v103
  %vm105 = vweird.f32 %v99
  %vm106 = vweird.f32 %v100
  %vm107 = vmor %vm105, %vm106
  %v108 = vsel %vm107, %v100, %v104
  %v109 = vand.u32 2147483647, %v99
  %vm110 = vcmp.eq.f32.partialorder %v109, 8.507059e+37
  %v111 = vand.u32 %v99, 2147483648
  %v112 = vor.u32 1.1754944e-38, %v111
  %v113 = vsel %vm110, %v112, %v108
  %v114 = vmul.f32 1.0, %v113
  %vm115 = vcmask 7168
  %116 = vst.msk [vmem:[%s5] sm:$0xff] %vm115, %v114
  // Predicated region
  $region22: #{fused_forward.1} parent=0 // pred_check
    _
  $region23: #{fused_forward.1} parent=0 // pred_check_branch
    %118 = sbr.rel (0) target = $region25
  $region24: #{fused_forward.1} parent=0 // pred_region
    _
  $region25: #{fused_forward.1} parent=0 // pred_fallthru
    _
  // Predicated region
  $region26: #{fused_forward.1} parent=0 // pred_check
    _
  $region27: #{fused_forward.1} parent=0 // pred_check_branch
    %120 = sbr.rel (0) target = $region29
  $region28: #{fused_forward.1} parent=0 // pred_region
    _
  $region29: #{fused_forward.1} parent=0 // pred_fallthru
    _

</llo_original>
